<compile_context>
chip_gen: v5e
topology: v5e:2x2
jax: 0.10.0
libtpu: 0.0.40
codegen_flags: <defaults>
</compile_context>

<pallas_src>
import functools

import jax
import jax.numpy as jnp
from jax.experimental import pallas as pl
from jax.experimental.pallas import tpu as pltpu

_IGNORE_INDEX = -100


def _nll_loss_kernel(logp_ref, tgt_ref, out_ref, sum_ref, cnt_ref,
                     *, n_rows, tile_n, ignore_index):
    # logp_ref: (tile_n, C) native-dtype log-probabilities (VMEM tile)
    # tgt_ref : (tile_n, 1) int32 class indices            (VMEM tile)
    # out_ref : (1, 1) f32 scalar loss (written at the last grid step)
    # sum_ref, cnt_ref: (1, 1) f32 accumulators (VMEM scratch, persist over grid)
    i = pl.program_id(0)

    @pl.when(i == 0)
    def _init():
        sum_ref[...] = jnp.zeros_like(sum_ref)
        cnt_ref[...] = jnp.zeros_like(cnt_ref)

    # Native dtype on the wire; upcast in-kernel for the VPU work / accumulation.
    logp = logp_ref[...].astype(jnp.float32)            # (tile_n, C)
    tgt = tgt_ref[...]                                   # (tile_n, 1) int32

    # Mask padded tail rows of the last tile and ignore_index targets.
    row = jax.lax.broadcasted_iota(jnp.int32, tgt.shape, 0) + i * tile_n
    valid = (row < n_rows) & (tgt != ignore_index)       # (tile_n, 1)

    # One-hot select logp[r, tgt[r]] via a lane-index compare (no gather on TPU).
    col = jax.lax.broadcasted_iota(jnp.int32, logp.shape, 1)
    hit = (col == tgt) & valid                           # (tile_n, C)

    # Fused single reduction over the whole tile (no (tile_n,1) intermediate).
    sum_ref[...] += jnp.sum(jnp.where(hit, logp, 0.0), keepdims=True)
    cnt_ref[...] += jnp.sum(valid.astype(jnp.float32), keepdims=True)

    @pl.when(i == pl.num_programs(0) - 1)
    def _finalize():
        # mean over valid targets, negated (F.nll_loss reduction='mean')
        out_ref[...] = -sum_ref[...] / cnt_ref[...]


def nll_loss(log_probs: jax.Array, targets: jax.Array, *,
             ignore_index: int = _IGNORE_INDEX, tile_n: int | None = None) -> jax.Array:
    """Equivalent of F.nll_loss(log_probs, targets, reduction='mean')."""
    n, c = log_probs.shape
    itemsize = jnp.dtype(log_probs.dtype).itemsize
    # Sublane multiple for the block: 8 (f32), 16 (bf16), 32 (int8).
    sub = max(8, 32 // max(1, itemsize))

    if tile_n is None:
        # ~2 MiB log_probs tile (closer to HBM roofline than 1 MiB); cap at
        # 2048 rows to bound the 128-lane-padded int32 targets buffer
        # (1 MiB/buffer at 2048 rows).
        tile_n = min(2048, max(sub, (2 << 20) // max(1, c * itemsize)))
    n_pad = ((n + sub - 1) // sub) * sub
    tile_n = min(int(tile_n), n_pad)
    tile_n = max(sub, (tile_n // sub) * sub)

    num_tiles = pl.cdiv(n, tile_n)
    tgt2d = targets.astype(jnp.int32).reshape(n, 1)

    kernel = functools.partial(
        _nll_loss_kernel, n_rows=n, tile_n=tile_n, ignore_index=ignore_index)

    out = pl.pallas_call(
        kernel,
        out_shape=jax.ShapeDtypeStruct((1, 1), jnp.float32),
        grid_spec=pltpu.PrefetchScalarGridSpec(
            num_scalar_prefetch=0,
            grid=(num_tiles,),
            in_specs=[
                pl.BlockSpec((tile_n, c), lambda i: (i, 0)),
                pl.BlockSpec((tile_n, 1), lambda i: (i, 0)),
            ],
            out_specs=pl.BlockSpec((1, 1), lambda i: (0, 0)),
            scratch_shapes=[
                pltpu.VMEM((1, 1), jnp.float32),   # running sum of picked logp
                pltpu.VMEM((1, 1), jnp.float32),   # running valid-target count
            ],
        ),
        compiler_params=pltpu.CompilerParams(
            dimension_semantics=("arbitrary",),      # sequential accumulator axis
            vmem_limit_bytes=32 * 1024 * 1024,       # safe on v5e/v6e/v7x scoped limits
        ),
        cost_estimate=pl.CostEstimate(
            flops=2 * n * c,
            transcendentals=0,
            bytes_accessed=n * c * itemsize + n * 4 + 4,
        ),
    )(log_probs, tgt2d)
    return out[0, 0]


class ModelBase:
    """JAX/Pallas mirror of the PyTorch ModelBase (abstract, no parameters)."""

    def __init__(self, image_size: int, lr: float = 0.1):
        self.image_size = image_size
        self.lr = lr

    @property
    def loss_function(self):
        return nll_loss

    def forward(self, data):
        raise NotImplementedError


if __name__ == "__main__":
    key = jax.random.PRNGKey(0)
    k1, k2, k3, k4 = jax.random.split(key, 4)

    def ref_nll(logp, tgt, ignore_index=_IGNORE_INDEX):
        n, c = logp.shape
        valid = tgt != ignore_index
        picked = logp[jnp.arange(n), jnp.clip(tgt, 0, c - 1)]
        return -jnp.sum(jnp.where(valid, picked, 0.0)) / jnp.sum(valid.astype(jnp.float32))

    model = ModelBase(image_size=16)

    # Case 1: small single-tile batch, f32, with one ignore_index target.
    N, C = 8, 32
    logits = jax.random.normal(k1, (N, C), dtype=jnp.float32)
    log_probs = jax.nn.log_softmax(logits, axis=-1)
    targets = jax.random.randint(k2, (N,), 0, C, dtype=jnp.int32)
    targets = targets.at[3].set(_IGNORE_INDEX)
    loss = jax.block_until_ready(model.loss_function(log_probs, targets))
    ref = ref_nll(log_probs, targets)
    assert jnp.allclose(loss, ref, atol=1e-5, rtol=1e-5), (loss, ref)

    # Case 2: ragged batch, multi-tile grid, bf16 on the wire (upcast in-kernel).
    N2, C2 = 37, 128
    logits2 = jax.random.normal(k3, (N2, C2), dtype=jnp.float32)
    log_probs2 = jax.nn.log_softmax(logits2, axis=-1).astype(jnp.bfloat16)
    targets2 = jax.random.randint(k4, (N2,), 0, C2, dtype=jnp.int32)
    loss2 = jax.block_until_ready(nll_loss(log_probs2, targets2, tile_n=8))
    ref2 = ref_nll(log_probs2.astype(jnp.float32), targets2)
    assert jnp.allclose(loss2, ref2, atol=2e-2, rtol=2e-2), (loss2, ref2)

    print("KERNEL_OK")
</pallas_src>

<mosaic_0001>
module attributes {stable_mosaic.version = 11 : i64} {
  func.func @_nll_loss_kernel(%arg0: i32, %arg1: memref<8x32xf32, #tpu.memory_space<vmem>>, %arg2: memref<8x1xi32, #tpu.memory_space<vmem>>, %arg3: memref<1x1xf32, #tpu.memory_space<vmem>>, %arg4: memref<1x1xf32, #tpu.memory_space<vmem>>, %arg5: memref<1x1xf32, #tpu.memory_space<vmem>>) attributes {dimension_semantics = [#tpu.dimension_semantics<arbitrary>], iteration_bounds = array<i64: 1>, scalar_prefetch = 0 : i64, scratch_operands = 2 : i64, tpu.core_type = #tpu.core_type<tc>, window_params = [{transform_indices = @transform_0, window_bounds = array<i64: 8, 32>}, {transform_indices = @transform_1, window_bounds = array<i64: 8, 1>}, {pipeline_mode = #tpu.pipeline_mode<synchronous>, transform_indices = @transform_2, window_bounds = array<i64: 1, 1>}]} {
    %c0_i32 = arith.constant 0 : i32
    %0 = arith.cmpi eq, %arg0, %c0_i32 : i32
    %1 = arith.extui %0 : i1 to i32
    %c0_i32_0 = arith.constant 0 : i32
    %2 = arith.cmpi ne, %1, %c0_i32_0 : i32
    scf.if %2 {
      %cst_17 = arith.constant 0.000000e+00 : f32
      %42 = vector.broadcast %cst_17 : f32 to vector<1x1xf32>
      %c0_18 = arith.constant 0 : index
      %c0_19 = arith.constant 0 : index
      %43 = vector.load %arg4[%c0_18, %c0_19] : memref<1x1xf32, #tpu.memory_space<vmem>>, vector<1x1xf32>
      tpu.vector_store %arg4[%c0_18, %c0_19], %42 {strides = array<i32>} : memref<1x1xf32, #tpu.memory_space<vmem>>, vector<1x1xf32>,
      %cst_20 = arith.constant 0.000000e+00 : f32
      %44 = vector.broadcast %cst_20 : f32 to vector<1x1xf32>
      %c0_21 = arith.constant 0 : index
      %c0_22 = arith.constant 0 : index
      %45 = vector.load %arg5[%c0_21, %c0_22] : memref<1x1xf32, #tpu.memory_space<vmem>>, vector<1x1xf32>
      tpu.vector_store %arg5[%c0_21, %c0_22], %44 {strides = array<i32>} : memref<1x1xf32, #tpu.memory_space<vmem>>, vector<1x1xf32>,
    } else {
    }
    %c0 = arith.constant 0 : index
    %c0_1 = arith.constant 0 : index
    %3 = vector.load %arg1[%c0, %c0_1] : memref<8x32xf32, #tpu.memory_space<vmem>>, vector<8x32xf32>
    %c0_2 = arith.constant 0 : index
    %c0_3 = arith.constant 0 : index
    %4 = vector.load %arg2[%c0_2, %c0_3] : memref<8x1xi32, #tpu.memory_space<vmem>>, vector<8x1xi32>
    %5 = tpu.iota {dimensions = array<i32: 0>} : vector<8x1xi32>
    %c8_i32 = arith.constant 8 : i32
    %6 = arith.muli %arg0, %c8_i32 : i32
    %7 = vector.broadcast %6 : i32 to vector<8x1xi32>
    %8 = arith.addi %5, %7 : vector<8x1xi32>
    %c8_i32_4 = arith.constant 8 : i32
    %9 = vector.broadcast %c8_i32_4 : i32 to vector<8x1xi32>
    %10 = arith.cmpi slt, %8, %9 : vector<8x1xi32>
    %c-100_i32 = arith.constant -100 : i32
    %11 = vector.broadcast %c-100_i32 : i32 to vector<8x1xi32>
    %12 = arith.cmpi ne, %4, %11 : vector<8x1xi32>
    %13 = arith.andi %10, %12 : vector<8x1xi1>
    %14 = tpu.iota {dimensions = array<i32: 1>} : vector<8x32xi32>
    %15 = vector.broadcast %4 : vector<8x1xi32> to vector<8x32xi32>
    %16 = arith.cmpi eq, %14, %15 : vector<8x32xi32>
    %17 = vector.broadcast %13 : vector<8x1xi1> to vector<8x32xi1>
    %18 = arith.andi %16, %17 : vector<8x32xi1>
    %c0_5 = arith.constant 0 : index
    %c0_6 = arith.constant 0 : index
    %19 = vector.load %arg4[%c0_5, %c0_6] : memref<1x1xf32, #tpu.memory_space<vmem>>, vector<1x1xf32>
    %cst = arith.constant 0.000000e+00 : f32
    %20 = vector.broadcast %cst : f32 to vector<8x32xf32>
    %21 = arith.select %18, %3, %20 : vector<8x32xi1>, vector<8x32xf32>
    %22 = vector.shape_cast %21 : vector<8x32xf32> to vector<1x8x32xf32>
    %cst_7 = arith.constant dense<0.000000e+00> : vector<1xf32>
    %23 = vector.multi_reduction <add>, %22, %cst_7 [1, 2] : vector<1x8x32xf32> to vector<1xf32>
    %24 = vector.shape_cast %23 : vector<1xf32> to vector<1x1x1xf32>
    %25 = vector.extract %24[0, 0, 0] : f32 from vector<1x1x1xf32>
    %26 = vector.broadcast %25 : f32 to vector<1x1xf32>
    %27 = arith.addf %19, %26 : vector<1x1xf32>
    %c0_8 = arith.constant 0 : index
    %c0_9 = arith.constant 0 : index
    %28 = vector.load %arg4[%c0_8, %c0_9] : memref<1x1xf32, #tpu.memory_space<vmem>>, vector<1x1xf32>
    tpu.vector_store %arg4[%c0_8, %c0_9], %27 {strides = array<i32>} : memref<1x1xf32, #tpu.memory_space<vmem>>, vector<1x1xf32>,
    %c0_10 = arith.constant 0 : index
    %c0_11 = arith.constant 0 : index
    %29 = vector.load %arg5[%c0_10, %c0_11] : memref<1x1xf32, #tpu.memory_space<vmem>>, vector<1x1xf32>
    %30 = arith.extui %13 : vector<8x1xi1> to vector<8x1xi32>
    %31 = arith.sitofp %30 : vector<8x1xi32> to vector<8x1xf32>
    %32 = vector.shape_cast %31 : vector<8x1xf32> to vector<1x8x1xf32>
    %cst_12 = arith.constant dense<0.000000e+00> : vector<1xf32>
    %33 = vector.multi_reduction <add>, %32, %cst_12 [1, 2] : vector<1x8x1xf32> to vector<1xf32>
    %34 = vector.shape_cast %33 : vector<1xf32> to vector<1x1x1xf32>
    %35 = vector.extract %34[0, 0, 0] : f32 from vector<1x1x1xf32>
    %36 = vector.broadcast %35 : f32 to vector<1x1xf32>
    %37 = arith.addf %29, %36 : vector<1x1xf32>
    %c0_13 = arith.constant 0 : index
    %c0_14 = arith.constant 0 : index
    %38 = vector.load %arg5[%c0_13, %c0_14] : memref<1x1xf32, #tpu.memory_space<vmem>>, vector<1x1xf32>
    tpu.vector_store %arg5[%c0_13, %c0_14], %37 {strides = array<i32>} : memref<1x1xf32, #tpu.memory_space<vmem>>, vector<1x1xf32>,
    %c0_i32_15 = arith.constant 0 : i32
    %39 = arith.cmpi eq, %arg0, %c0_i32_15 : i32
    %40 = arith.extui %39 : i1 to i32
    %c0_i32_16 = arith.constant 0 : i32
    %41 = arith.cmpi ne, %40, %c0_i32_16 : i32
    scf.if %41 {
      %c0_17 = arith.constant 0 : index
      %c0_18 = arith.constant 0 : index
      %42 = vector.load %arg4[%c0_17, %c0_18] : memref<1x1xf32, #tpu.memory_space<vmem>>, vector<1x1xf32>
      %cst_19 = arith.constant 0.000000e+00 : f32
      %43 = vector.broadcast %cst_19 : f32 to vector<1x1xf32>
      %44 = arith.subf %43, %42 : vector<1x1xf32>
      %c0_20 = arith.constant 0 : index
      %c0_21 = arith.constant 0 : index
      %45 = vector.load %arg5[%c0_20, %c0_21] : memref<1x1xf32, #tpu.memory_space<vmem>>, vector<1x1xf32>
      %46 = arith.divf %44, %45 : vector<1x1xf32>
      %c0_22 = arith.constant 0 : index
      %c0_23 = arith.constant 0 : index
      %47 = vector.load %arg3[%c0_22, %c0_23] : memref<1x1xf32, #tpu.memory_space<vmem>>, vector<1x1xf32>
      tpu.vector_store %arg3[%c0_22, %c0_23], %46 {strides = array<i32>} : memref<1x1xf32, #tpu.memory_space<vmem>>, vector<1x1xf32>,
    } else {
    }
    return
  }
  func.func @transform_0(%arg0: i32) -> (i32, i32) {
    %c0_i32 = arith.constant 0 : i32
    %c0_i32_0 = arith.constant 0 : i32
    return %arg0, %c0_i32 : i32, i32
  }
  func.func @transform_1(%arg0: i32) -> (i32, i32) {
    %c0_i32 = arith.constant 0 : i32
    %c0_i32_0 = arith.constant 0 : i32
    return %arg0, %c0_i32 : i32, i32
  }
  func.func @transform_2(%arg0: i32) -> (i32, i32) {
    %c0_i32 = arith.constant 0 : i32
    %c0_i32_0 = arith.constant 0 : i32
    %c0_i32_1 = arith.constant 0 : i32
    return %c0_i32, %c0_i32_0 : i32, i32
  }
}

</mosaic_0001>

<llo_original>
// kernel: tpu_custom_call.1
$region0: #{tpu_custom_call.1}
  #allocation0 [shape = 'u32[]', space=smem, size = 0x4, offset = 0x4, fixed_abs, tag = 'smem constant byte address 0x4 - core index']
  #allocation1 [shape = 'u32[72,128]{1,0:T(1,128)}', space=vmem, size = 0x9000, scoped, tag = 'internal scratch']
  #allocation2 [shape = 'f32[1,1]{1,0:T(1,128)}', space=vmem, size = 0x200, scoped, tag = 'scratch operand']
  #allocation3 [shape = 'f32[1,1]{1,0:T(1,128)}', space=vmem, size = 0x200, scoped, tag = 'scratch operand']
  %s0 = inlined_call_operand.vmem [shape: f32[8,32], index: 0, kind: input, shape index: {}]
  %s1 = inlined_call_operand.vmem [shape: s32[8,1], index: 1, kind: input, shape index: {}]
  %s2 = inlined_call_operand.hbm [shape: f32[1,1], index: 2, kind: output, shape index: {}]
  %s3 = sld [smem:[#allocation0]]
  $region26: #{tpu_custom_call.1} parent=0
    _
  %s5 = ssub.s32 1, %s3
  %s6 = scalar_select 0, %s5, %s3
  $region1: #{tpu_custom_call.1} parent=0
    #allocation4 [shape = 'u8[512]{0}', space=vmem, size = 0x400, scoped, tag = 'output window, operand 0, single buffered']
    #allocation5 [shape = 's32[1]{0}', space=sflag, size = 0x4, scoped, tag = 'scoped memory for tpu_custom_call.1']
    %7 = vsyncpa [#allocation5], 0
    // Predicated region
    $region2: #{tpu_custom_call.1} parent=1 // pred_check
      _
    $region3: #{tpu_custom_call.1} parent=1 // pred_check_branch
      %9 = sbr.rel (0) target = $region5
    $region4: #{tpu_custom_call.1} parent=1 // pred_region
      _
    $region5: #{tpu_custom_call.1} parent=1 // pred_fallthru
      _
    // Predicated region
    $region6: #{tpu_custom_call.1} parent=1 // pred_check
      _
    $region7: #{tpu_custom_call.1} parent=1 // pred_check_branch
      %11 = sbr.rel (0) target = $region9
    $region8: #{tpu_custom_call.1} parent=1 // pred_region
      _
    $region9: #{tpu_custom_call.1} parent=1 // pred_fallthru
      _
    %p12 = scmp.eq.s32.totalorder 0, 0
    // Predicated region
    $region10: #{tpu_custom_call.1} parent=1 // pred_check
      %p13 = pneg %p12
    $region11: #{tpu_custom_call.1} parent=1 // pred_check_branch
      %15 = sbr.rel (%p13) target = $region13
    $region12: #{tpu_custom_call.1} parent=1 // pred_region
      %vm16 = vcmask 0
      %17 = vst.msk [vmem:[#allocation2] sm:$0x1] %vm16, 0.0
      %18 = vst.msk [vmem:[#allocation3] sm:$0x1] %vm16, 0.0
    $region13: #{tpu_custom_call.1} parent=1 // pred_fallthru
      _
    %v19 = vld [vmem:[%s0] sm:$0xff]
    %v20 = vld [vmem:[%s1] sm:$0xff]
    %v21 = vlaneseq
    %v22 = vshrl.u32 %v21, 7
    %s23 = smul.u32 0, 8
    %v24 = vstv %s23
    %v25 = vadd.s32 %v22, %v24
    %vm26 = vcmp.lt.s32.totalorder %v25, 8
    %vm27 = vcmp.ne.s32.totalorder %v20, 4294967196
    %vm28 = vmand %vm26, %vm27
    %v29 = vlaneseq
    %v30 = vand.u32 %v29, 127
    %31 = vset.pattern.permute.xlu0 0
    %32 = vperm.xlu0 %31, %v20
    %v33 = vpop.permute.xlu0 %32
    %vm34 = vcmp.eq.s32.totalorder %v30, %v33
    %v35 = vsel %vm28, 1, 0
    %36 = vset.pattern.permute.xlu0 0
    %37 = vperm.xlu0 %36, %v35
    %v38 = vpop.permute.xlu0 %37
    %vm39 = vcmp.eq.s32.totalorder %v38, 1
    %vm40 = vmand %vm34, %vm39
    %v41 = vld [vmem:[#allocation2] sm:$0x1]
    %v42 = vsel %vm40, %v19, 0.0
    %vm43 = vcmask 261120
    %v44 = vsel %vm43, %v42, 0.0
    %45 = vadd.xlane.f32.xlu0 %v44
    %v46 = vpop.xlane.xlu0 %45
    %v47 = vrot.slane %v46, 4
    %v48 = vadd.f32 %v46, %v47
    %v49 = vrot.slane %v48, 2
    %v50 = vadd.f32 %v48, %v49
    %v51 = vrot.slane %v50, 1
    %v52 = vadd.f32 %v50, %v51
    %s53 = vtos %v52
    %v54 = vstv %s53
    %v55 = vadd.f32 %v41, %v54
    %vm56 = vcmask 0
    %57 = vst.msk [vmem:[#allocation2] sm:$0x1] %vm56, %v55
    %v58 = vld [vmem:[#allocation3] sm:$0x1]
    %v59 = vcvt.s32.f32 %v35
    %vm60 = vcmask 7168
    %v61 = vsel %vm60, %v59, 0.0
    %62 = vadd.xlane.f32.xlu0 %v61
    %v63 = vpop.xlane.xlu0 %62
    %v64 = vrot.slane %v63, 4
    %v65 = vadd.f32 %v63, %v64
    %v66 = vrot.slane %v65, 2
    %v67 = vadd.f32 %v65, %v66
    %v68 = vrot.slane %v67, 1
    %v69 = vadd.f32 %v67, %v68
    %s70 = vtos %v69
    %v71 = vstv %s70
    %v72 = vadd.f32 %v58, %v71
    %73 = vst.msk [vmem:[#allocation3] sm:$0x1] %vm56, %v72
    // Predicated region
    $region14: #{tpu_custom_call.1} parent=1 // pred_check
      %p74 = pneg %p12
    $region15: #{tpu_custom_call.1} parent=1 // pred_check_branch
      %76 = sbr.rel (%p74) target = $region17
    $region16: #{tpu_custom_call.1} parent=1 // pred_region
      %v77 = vld [vmem:[#allocation2] sm:$0x1]
      %v78 = vsub.f32 0.0, %v77
      %v79 = vld [vmem:[#allocation3] sm:$0x1]
      %v80 = vrcp.pop %v79
      %v81 = vmul.f32 %v79, %v80
      %v82 = vsub.f32 1.0, %v81
      %v83 = vmul.f32 %v80, %v82
      %v84 = vadd.f32 %v80, %v83
      %vm85 = vweird.f32 %v79
      %vm86 = vweird.f32 %v80
      %vm87 = vmor %vm85, %vm86
      %v88 = vsel %vm87, %v80, %v84
      %v89 = vand.u32 2147483647, %v79
      %vm90 = vcmp.eq.f32.partialorder %v89, 8.507059e+37
      %v91 = vand.u32 %v79, 2147483648
      %v92 = vor.u32 1.1754944e-38, %v91
      %v93 = vsel %vm90, %v92, %v88
      %v94 = vmul.f32 %v78, %v93
      %95 = vst.msk [vmem:[#allocation4] sm:$0x1] %vm56, %v94
    $region17: #{tpu_custom_call.1} parent=1 // pred_fallthru
      _
    // Predicated region
    $region18: #{tpu_custom_call.1} parent=1 // pred_check
      _
    $region19: #{tpu_custom_call.1} parent=1 // pred_check_branch
      %97 = sbr.rel (0) target = $region21
    $region20: #{tpu_custom_call.1} parent=1 // pred_region
      %99 = vsyncadd [#allocation5], 0
      %s101 = sshll.u32 [#allocation4], 4
      %s102 = int_to_ptr.vmem [resolvable:$true] %s101
      %s103 = sshll.u32 %s2, 4
      %s104 = int_to_ptr.hbm [resolvable:$true] %s103
      %106 = dma.vmem_to_hbm [thread:$0]  %s102, 16, %s104, [#allocation5]
    $region21: #{tpu_custom_call.1} parent=1 // pred_fallthru
      _
    // Predicated region
    $region22: #{tpu_custom_call.1} parent=1 // pred_check
      _
    $region23: #{tpu_custom_call.1} parent=1 // pred_check_branch
      %108 = sbr.rel (0) target = $region25
    $region24: #{tpu_custom_call.1} parent=1 // pred_region
      %110 = dma.done [#allocation5], 16
    $region25: #{tpu_custom_call.1} parent=1 // pred_fallthru
      _
    %111 = vsyncpa [#allocation5], 1

</llo_original>
